<compile_context>
chip_gen: v6e
topology: v6e:2x2x1
jax: 0.10.0
libtpu: 0.0.40
codegen_flags: <defaults>
</compile_context>

<pallas_src>
import functools

import jax
import jax.numpy as jnp
from jax.experimental import pallas as pl
from jax.experimental.pallas import tpu as pltpu

_LANE = 128
_MAX_TILE_BYTES = 1 << 20            # ~1 MiB (f32-equivalent) per in/out tile buffer
_VMEM_LIMIT_BYTES = 32 * 1024 * 1024  # safe on v5e/v6e (128 MiB) and v7x (64 MiB)


def _pow_p(v, p):
    if p == 1.0:
        return v
    if p == 2.0:
        return v * v
    safe = jnp.where(v > 0.0, v, 1.0)
    return jnp.where(v > 0.0, safe ** p, 0.0)


def _root_p(v, p):
    if p == 1.0:
        return v
    if p == 2.0:
        return jnp.sqrt(v)
    safe = jnp.where(v > 0.0, v, 1.0)
    return jnp.where(v > 0.0, safe ** (1.0 / p), 0.0)


def _normalised_abs_kernel(x_ref, o_ref, *, p: float, eps: float, seg_d: int):
    a = jnp.abs(x_ref[...].astype(jnp.float32))
    lane = a.shape[-1]

    if seg_d == lane:
        # Full-row reduction -> one scalar norm per row.
        norm = _root_p(jnp.sum(_pow_p(a, p), axis=-1, keepdims=True), p)   # (tm, 1)
        inv = 1.0 / jnp.maximum(norm, eps)   # one reciprocal per row, not per element
        o_ref[...] = (a * inv).astype(o_ref.dtype)
    else:
        # Lane-dense path: each 128-wide row packs lane//seg_d independent groups.
        # Segmented sums via one MXU matmul against a block-diagonal ones matrix.
        shift = seg_d.bit_length() - 1        # seg_d divides 128 -> power of two
        i_blk = jax.lax.broadcasted_iota(jnp.int32, (lane, lane), 0) >> shift
        j_blk = jax.lax.broadcasted_iota(jnp.int32, (lane, lane), 1) >> shift
        blockdiag = (i_blk == j_blk).astype(jnp.float32)                   # (128, 128)
        segsum = jnp.dot(_pow_p(a, p), blockdiag,
                         preferred_element_type=jnp.float32)
        norm = _root_p(segsum, p)
        o_ref[...] = (a / jnp.maximum(norm, eps)).astype(o_ref.dtype)


def _round_up(x: int, m: int) -> int:
    return ((x + m - 1) // m) * m


def normalised_abs(s: jax.Array, p: float = 1.0, eps: float = 1e-12) -> jax.Array:
    """NormalisedAbs forward (dim=-1) for any >=1-D tensor."""
    orig_shape = s.shape
    d = int(orig_shape[-1])
    rows = 1
    for n in orig_shape[:-1]:
        rows *= int(n)
    p = float(p)
    eps = float(eps)

    # Sublane tile per dtype (sub-32-bit dtypes pack rows along sublanes).
    itemsize = jnp.dtype(s.dtype).itemsize
    sublane = {4: 8, 2: 16, 1: 32}.get(itemsize, 8)

    # Lane-dense grouping: pack g rows of width d into one 128-lane row.
    if d < _LANE and _LANE % d == 0:
        g = _LANE // d
    else:
        g = 1
    lane_d = g * d
    seg_d = d if g > 1 else lane_d

    # Row tile: biggest multiple of the sublane tile within the VMEM budget.
    tm_cap = max(sublane, (_MAX_TILE_BYTES // (lane_d * 4)) // sublane * sublane)
    rows_g_needed = -(-rows // g)                      # ceil(rows / g)
    tm = min(tm_cap, _round_up(rows_g_needed, sublane))
    rows_g = _round_up(rows_g_needed, tm)
    padded_rows = rows_g * g

    x2d = s.reshape(rows, d)
    if padded_rows != rows:
        # Zero rows normalise to zero (eps clamp), then get sliced off.
        x2d = jnp.pad(x2d, ((0, padded_rows - rows), (0, 0)))
    xk = x2d.reshape(rows_g, lane_d)

    grid = (rows_g // tm,)

    out = pl.pallas_call(
        functools.partial(_normalised_abs_kernel, p=p, eps=eps, seg_d=seg_d),
        out_shape=jax.ShapeDtypeStruct((rows_g, lane_d), s.dtype),
        grid_spec=pltpu.PrefetchScalarGridSpec(
            num_scalar_prefetch=0,
            grid=grid,
            in_specs=[pl.BlockSpec((tm, lane_d), lambda i: (i, 0))],
            out_specs=pl.BlockSpec((tm, lane_d), lambda i: (i, 0)),
        ),
        compiler_params=pltpu.CompilerParams(
            dimension_semantics=("parallel",),
            vmem_limit_bytes=_VMEM_LIMIT_BYTES,
        ),
    )(xk)

    out2d = out.reshape(padded_rows, d)
    if padded_rows != rows:
        out2d = out2d[:rows]
    return out2d.reshape(orig_shape)


def _reference(s: jax.Array, p: float = 1.0, eps: float = 1e-12) -> jax.Array:
    """Pure-JAX reference matching torch.nn.functional.normalize(|s|, p, dim=-1)."""
    a = jnp.abs(s.astype(jnp.float32))
    norm = jnp.sum(a ** p, axis=-1, keepdims=True) ** (1.0 / p)
    return (a / jnp.maximum(norm, eps)).astype(s.dtype)


if __name__ == "__main__":
    key = jax.random.PRNGKey(0)

    # NCHW input (batch=2, channels=4, spatial=16x16): small-W lane-dense path, p=1.
    x = jax.random.normal(key, (2, 4, 16, 16), dtype=jnp.float32)
    out = jax.block_until_ready(normalised_abs(x, p=1.0))
    ref = _reference(x, p=1.0)
    assert out.shape == x.shape and out.dtype == x.dtype
    assert jnp.allclose(out, ref, atol=1e-5, rtol=1e-5), float(jnp.max(jnp.abs(out - ref)))

    # Wide last dim: full-row reduction path with per-row reciprocal, p=2.
    x2 = jax.random.normal(jax.random.PRNGKey(1), (2, 3, 8, 128), dtype=jnp.float32)
    out2 = jax.block_until_ready(normalised_abs(x2, p=2.0))
    ref2 = _reference(x2, p=2.0)
    assert jnp.allclose(out2, ref2, atol=1e-5, rtol=1e-5), float(jnp.max(jnp.abs(out2 - ref2)))

    print("KERNEL_OK")
</pallas_src>

<mosaic_0001>
module attributes {stable_mosaic.version = 11 : i64} {
  func.func @_normalised_abs_kernel(%arg0: i32, %arg1: memref<16x128xf32, #tpu.memory_space<vmem>>, %arg2: memref<16x128xf32, #tpu.memory_space<vmem>>) attributes {dimension_semantics = [#tpu.dimension_semantics<parallel>], iteration_bounds = array<i64: 1>, scalar_prefetch = 0 : i64, scratch_operands = 0 : i64, tpu.core_type = #tpu.core_type<tc>, window_params = [{transform_indices = @transform_0, window_bounds = array<i64: 16, 128>}, {transform_indices = @transform_1, window_bounds = array<i64: 16, 128>}]} {
    %c0 = arith.constant 0 : index
    %c0_0 = arith.constant 0 : index
    %0 = vector.load %arg1[%c0, %c0_0] : memref<16x128xf32, #tpu.memory_space<vmem>>, vector<16x128xf32>
    %1 = math.absf %0 : vector<16x128xf32>
    %2 = tpu.iota {dimensions = array<i32: 0>} : vector<128x128xi32>
    %c4_i32 = arith.constant 4 : i32
    %3 = vector.broadcast %c4_i32 : i32 to vector<128x128xi32>
    %4 = arith.shrsi %2, %3 : vector<128x128xi32>
    %5 = tpu.iota {dimensions = array<i32: 1>} : vector<128x128xi32>
    %c4_i32_1 = arith.constant 4 : i32
    %6 = vector.broadcast %c4_i32_1 : i32 to vector<128x128xi32>
    %7 = arith.shrsi %5, %6 : vector<128x128xi32>
    %8 = arith.cmpi eq, %4, %7 : vector<128x128xi32>
    %9 = arith.extui %8 : vector<128x128xi1> to vector<128x128xi32>
    %10 = arith.sitofp %9 : vector<128x128xi32> to vector<128x128xf32>
    %cst = arith.constant dense<0.000000e+00> : vector<16x128xf32>
    %11 = tpu.matmul %1, %10, %cst {dimension_numbers = #tpu.dot_dimension_numbers<[1], [0], [0], [1], [0, 0, 1, 1], [], []>} : vector<16x128xf32>, vector<128x128xf32>, vector<16x128xf32> -> vector<16x128xf32>
    %cst_2 = arith.constant 9.99999996E-13 : f32
    %12 = vector.broadcast %cst_2 : f32 to vector<16x128xf32>
    %13 = arith.maximumf %11, %12 : vector<16x128xf32>
    %14 = arith.divf %1, %13 : vector<16x128xf32>
    %c0_3 = arith.constant 0 : index
    %c0_4 = arith.constant 0 : index
    %15 = vector.load %arg2[%c0_3, %c0_4] : memref<16x128xf32, #tpu.memory_space<vmem>>, vector<16x128xf32>
    tpu.vector_store %arg2[%c0_3, %c0_4], %14 {strides = array<i32>} : memref<16x128xf32, #tpu.memory_space<vmem>>, vector<16x128xf32>,
    return
  }
  func.func @transform_0(%arg0: i32) -> (i32, i32) {
    %c0_i32 = arith.constant 0 : i32
    %c0_i32_0 = arith.constant 0 : i32
    return %arg0, %c0_i32 : i32, i32
  }
  func.func @transform_1(%arg0: i32) -> (i32, i32) {
    %c0_i32 = arith.constant 0 : i32
    %c0_i32_0 = arith.constant 0 : i32
    return %arg0, %c0_i32 : i32, i32
  }
}

</mosaic_0001>

<llo_original>
// kernel: tpu_custom_call.1
$region0: #{tpu_custom_call.1}
  #allocation0 [shape = 'u32[]', space=smem, size = 0x4, offset = 0x4, fixed_abs, tag = 'smem constant byte address 0x4 - core index']
  #allocation1 [shape = 'u32[144,128]{1,0:T(1,128)}', space=vmem, size = 0x12000, scoped, tag = 'internal scratch']
  %s0 = inlined_call_operand.hbm [shape: f32[16,128], index: 0, kind: input, shape index: {}]
  %s1 = inlined_call_operand.hbm [shape: f32[16,128], index: 1, kind: output, shape index: {}]
  %s2 = sld [smem:[#allocation0]]
  $region18: #{tpu_custom_call.1} parent=0
    _
  %s4 = ssub.s32 1, %s2
  %s5 = scalar_select 0, %s4, %s2
  $region1: #{tpu_custom_call.1} parent=0
    #allocation2 [shape = 'u8[8192]{0}', space=vmem, size = 0x2000, scoped, tag = 'input window, operand 0, single buffered']
    #allocation3 [shape = 's32[1]{0}', space=sflag, size = 0x4, scoped, tag = 'scoped memory for tpu_custom_call.1']
    #allocation4 [shape = 's32[1]{0}', space=sflag, size = 0x4, scoped, tag = 'scoped memory for tpu_custom_call.1']
    #allocation5 [shape = 'u8[8192]{0}', space=vmem, size = 0x2000, scoped, tag = 'output window, operand 0, single buffered']
    %6 = vsyncpa [#allocation3], 0
    %7 = vsyncpa [#allocation4], 0
    // Predicated region
    $region2: #{tpu_custom_call.1} parent=1 // pred_check
      _
    $region3: #{tpu_custom_call.1} parent=1 // pred_check_branch
      %9 = sbr.rel (0) target = $region5
    $region4: #{tpu_custom_call.1} parent=1 // pred_region
      %s11 = ssub.s32 256, 256
      %12 = vsyncadd [#allocation3], %s11
      %s13 = sshll.u32 [#allocation2], 4
      %s14 = int_to_ptr.vmem [resolvable:$true] %s13
      %19 = dma.hbm_to_vmem [thread:$0]  %s0, 256, %s14, [#allocation3], 128, 128, 8
    $region5: #{tpu_custom_call.1} parent=1 // pred_fallthru
      _
    // Predicated region
    $region6: #{tpu_custom_call.1} parent=1 // pred_check
      _
    $region7: #{tpu_custom_call.1} parent=1 // pred_check_branch
      %21 = sbr.rel (0) target = $region9
    $region8: #{tpu_custom_call.1} parent=1 // pred_region
      %22 = dma.done [#allocation3], 256
    $region9: #{tpu_custom_call.1} parent=1 // pred_fallthru
      _
    %v23 = vld [vmem:[#allocation2] sm:$0xff]
    %v24 = vld [vmem:[#allocation2 + $0x8] sm:$0xff]
    %v25 = vand.u32 2147483647, %v23
    %v26 = vand.u32 2147483647, %v24
    %v27 = vlaneseq
    %v28 = vshrl.u32 %v27, 7
    %v29 = vadd.s32 %v28, 8
    %v30 = vadd.s32 %v28, 16
    %v31 = vadd.s32 %v28, 24
    %v32 = vadd.s32 %v28, 32
    %v33 = vadd.s32 %v28, 40
    %v34 = vadd.s32 %v28, 48
    %v35 = vadd.s32 %v28, 56
    %v36 = vadd.s32 %v28, 64
    %v37 = vadd.s32 %v28, 72
    %v38 = vadd.s32 %v28, 80
    %v39 = vadd.s32 %v28, 88
    %v40 = vadd.s32 %v28, 96
    %v41 = vadd.s32 %v28, 104
    %v42 = vadd.s32 %v28, 112
    %v43 = vadd.s32 %v28, 120
    %v44 = vshra.s32 %v28, 4
    %v45 = vshra.s32 %v29, 4
    %v46 = vshra.s32 %v30, 4
    %v47 = vshra.s32 %v31, 4
    %v48 = vshra.s32 %v32, 4
    %v49 = vshra.s32 %v33, 4
    %v50 = vshra.s32 %v34, 4
    %v51 = vshra.s32 %v35, 4
    %v52 = vshra.s32 %v36, 4
    %v53 = vshra.s32 %v37, 4
    %v54 = vshra.s32 %v38, 4
    %v55 = vshra.s32 %v39, 4
    %v56 = vshra.s32 %v40, 4
    %v57 = vshra.s32 %v41, 4
    %v58 = vshra.s32 %v42, 4
    %v59 = vshra.s32 %v43, 4
    %v60 = vlaneseq
    %v61 = vand.u32 %v60, 127
    %v62 = vshra.s32 %v61, 4
    %vm63 = vcmp.eq.s32.totalorder %v44, %v62
    %vm64 = vcmp.eq.s32.totalorder %v45, %v62
    %vm65 = vcmp.eq.s32.totalorder %v46, %v62
    %vm66 = vcmp.eq.s32.totalorder %v47, %v62
    %vm67 = vcmp.eq.s32.totalorder %v48, %v62
    %vm68 = vcmp.eq.s32.totalorder %v49, %v62
    %vm69 = vcmp.eq.s32.totalorder %v50, %v62
    %vm70 = vcmp.eq.s32.totalorder %v51, %v62
    %vm71 = vcmp.eq.s32.totalorder %v52, %v62
    %vm72 = vcmp.eq.s32.totalorder %v53, %v62
    %vm73 = vcmp.eq.s32.totalorder %v54, %v62
    %vm74 = vcmp.eq.s32.totalorder %v55, %v62
    %vm75 = vcmp.eq.s32.totalorder %v56, %v62
    %vm76 = vcmp.eq.s32.totalorder %v57, %v62
    %vm77 = vcmp.eq.s32.totalorder %v58, %v62
    %vm78 = vcmp.eq.s32.totalorder %v59, %v62
    %v79 = vsel %vm63, 1, 0
    %v80 = vsel %vm64, 1, 0
    %v81 = vsel %vm65, 1, 0
    %v82 = vsel %vm66, 1, 0
    %v83 = vsel %vm67, 1, 0
    %v84 = vsel %vm68, 1, 0
    %v85 = vsel %vm69, 1, 0
    %v86 = vsel %vm70, 1, 0
    %v87 = vsel %vm71, 1, 0
    %v88 = vsel %vm72, 1, 0
    %v89 = vsel %vm73, 1, 0
    %v90 = vsel %vm74, 1, 0
    %v91 = vsel %vm75, 1, 0
    %v92 = vsel %vm76, 1, 0
    %v93 = vsel %vm77, 1, 0
    %v94 = vsel %vm78, 1, 0
    %v95 = vcvt.s32.f32 %v79
    %v96 = vcvt.s32.f32 %v80
    %v97 = vcvt.s32.f32 %v81
    %v98 = vcvt.s32.f32 %v82
    %v99 = vcvt.s32.f32 %v83
    %v100 = vcvt.s32.f32 %v84
    %v101 = vcvt.s32.f32 %v85
    %v102 = vcvt.s32.f32 %v86
    %v103 = vcvt.s32.f32 %v87
    %v104 = vcvt.s32.f32 %v88
    %v105 = vcvt.s32.f32 %v89
    %v106 = vcvt.s32.f32 %v90
    %v107 = vcvt.s32.f32 %v91
    %v108 = vcvt.s32.f32 %v92
    %v109 = vcvt.s32.f32 %v93
    %v110 = vcvt.s32.f32 %v94
    %111 = vmatprep.subr.mxu0 0.0
    %112 = vmatpush1.msra.mxu0 %v110
    %113 = vmatprep.subr.mxu0 0.0
    %114 = vmatpush1.msra.mxu0 %v109
    %115 = vmatprep.subr.mxu0 0.0
    %116 = vmatpush1.msra.mxu0 %v108
    %117 = vmatprep.subr.mxu0 0.0
    %118 = vmatpush1.msra.mxu0 %v107
    %119 = vmatprep.subr.mxu0 0.0
    %120 = vmatpush1.msra.mxu0 %v106
    %121 = vmatprep.subr.mxu0 0.0
    %122 = vmatpush1.msra.mxu0 %v105
    %123 = vmatprep.subr.mxu0 0.0
    %124 = vmatpush1.msra.mxu0 %v104
    %125 = vmatprep.subr.mxu0 0.0
    %126 = vmatpush1.msra.mxu0 %v103
    %127 = vmatprep.subr.mxu0 0.0
    %128 = vmatpush1.msra.mxu0 %v102
    %129 = vmatprep.subr.mxu0 0.0
    %130 = vmatpush1.msra.mxu0 %v101
    %131 = vmatprep.subr.mxu0 0.0
    %132 = vmatpush1.msra.mxu0 %v100
    %133 = vmatprep.subr.mxu0 0.0
    %134 = vmatpush1.msra.mxu0 %v99
    %135 = vmatprep.subr.mxu0 0.0
    %136 = vmatpush1.msra.mxu0 %v98
    %137 = vmatprep.subr.mxu0 0.0
    %138 = vmatpush1.msra.mxu0 %v97
    %139 = vmatprep.subr.mxu0 0.0
    %140 = vmatpush1.msra.mxu0 %v96
    %141 = vmatprep.subr.mxu0 0.0
    %142 = vmatpush1.msra.mxu0 %v95
    %143 = vmatprep.subr.mxu0 0.0
    %144 = vmatpush2.msra.mxu0 0.0
    %145 = vmatprep.subr.mxu0 0.0
    %146 = vmatpush2.msra.mxu0 0.0
    %147 = vmatprep.subr.mxu0 0.0
    %148 = vmatpush2.msra.mxu0 0.0
    %149 = vmatprep.subr.mxu0 0.0
    %150 = vmatpush2.msra.mxu0 0.0
    %151 = vmatprep.subr.mxu0 0.0
    %152 = vmatpush2.msra.mxu0 0.0
    %153 = vmatprep.subr.mxu0 0.0
    %154 = vmatpush2.msra.mxu0 0.0
    %155 = vmatprep.subr.mxu0 0.0
    %156 = vmatpush2.msra.mxu0 0.0
    %157 = vmatprep.subr.mxu0 0.0
    %158 = vmatpush2.msra.mxu0 0.0
    %159 = vmatprep.subr.mxu0 0.0
    %160 = vmatpush2.msra.mxu0 0.0
    %161 = vmatprep.subr.mxu0 0.0
    %162 = vmatpush2.msra.mxu0 0.0
    %163 = vmatprep.subr.mxu0 0.0
    %164 = vmatpush2.msra.mxu0 0.0
    %165 = vmatprep.subr.mxu0 0.0
    %166 = vmatpush2.msra.mxu0 0.0
    %167 = vmatprep.subr.mxu0 0.0
    %168 = vmatpush2.msra.mxu0 0.0
    %169 = vmatprep.subr.mxu0 0.0
    %170 = vmatpush2.msra.mxu0 0.0
    %171 = vmatprep.subr.mxu0 0.0
    %172 = vmatpush2.msra.mxu0 0.0
    %173 = vmatprep.subr.mxu0 0.0
    %174 = vmatpush2.msra.mxu0 0.0
    %175 = vmatprep.mubr.f32.mxu0 0.0
    %176 = vmatmul.mubr.f32.gmra.mxu0 %v25
    %v177 = vpop.f32.mrf.mxu0
    %v178 = vadd.f32 0.0, %v177
    %v179 = vpop.f32.mrf.mxu0
    %180 = vmatprep.mubr.f32.mxu0 0.0
    %181 = vmatmul.mubr.f32.gmra.mxu0 %v26
    %v182 = vpop.f32.mrf.mxu0
    %v183 = vadd.f32 0.0, %v182
    %v184 = vpop.f32.mrf.mxu0
    %185 = vdwg.mxu0
    %v186 = vmax.f32 %v178, 1e-12
    %v187 = vmax.f32 %v183, 1e-12
    %v188 = vrcp.pop %v186
    %v189 = vmul.f32 %v25, %v188
    %v190 = vrcp.pop %v187
    %v191 = vmul.f32 %v26, %v190
    %192 = vst [vmem:[#allocation5] sm:$0xff] %v189
    %193 = vst [vmem:[#allocation5 + $0x8] sm:$0xff] %v191
    // Predicated region
    $region10: #{tpu_custom_call.1} parent=1 // pred_check
      _
    $region11: #{tpu_custom_call.1} parent=1 // pred_check_branch
      %195 = sbr.rel (0) target = $region13
    $region12: #{tpu_custom_call.1} parent=1 // pred_region
      %s197 = ssub.s32 256, 256
      %198 = vsyncadd [#allocation4], %s197
      %s199 = sshll.u32 [#allocation5], 4
      %s200 = int_to_ptr.vmem [resolvable:$true] %s199
      %205 = dma.vmem_to_hbm [thread:$0]  %s200, 256, %s1, [#allocation4], 128, 128, 8
    $region13: #{tpu_custom_call.1} parent=1 // pred_fallthru
      _
    // Predicated region
    $region14: #{tpu_custom_call.1} parent=1 // pred_check
      _
    $region15: #{tpu_custom_call.1} parent=1 // pred_check_branch
      %207 = sbr.rel (0) target = $region17
    $region16: #{tpu_custom_call.1} parent=1 // pred_region
      %208 = dma.done [#allocation4], 256
    $region17: #{tpu_custom_call.1} parent=1 // pred_fallthru
      _
    %209 = vsyncpa [#allocation3], 1
    %210 = vsyncpa [#allocation4], 1

</llo_original>
